<compile_context>
chip_gen: v7x
topology: tpu7x:2x2x1
jax: 0.10.0
libtpu: 0.0.40
codegen_flags: <defaults>
</compile_context>

<pallas_src>
import functools

import jax
import jax.numpy as jnp
from jax.experimental import pallas as pl
from jax.experimental.pallas import tpu as pltpu


def _cdiv(a, b):
    return -(-a // b)


def _round_down_128(x):
    return max(128, (x // 128) * 128)


def _vmem_capacity_bytes():
    try:
        return int(pltpu.get_tpu_info().vmem_capacity_bytes)
    except Exception:  # non-TPU / older runtime fallback
        return 128 << 20


def _compute_block(x2d, w_ref, scale_ref, bias_ref, out_dtype):
    # In-kernel f32->bf16 cast of activations feeds the MXU; f32 accumulation;
    # per-output-channel BN scale/bias applied in f32 in the epilogue.
    acc = jnp.dot(w_ref[...], x2d.astype(jnp.bfloat16),
                  preferred_element_type=jnp.float32)
    return (acc * scale_ref[...] + bias_ref[...]).astype(out_dtype)


def _kernel_batched(x_ref, w_ref, scale_ref, bias_ref, o_ref):
    # x_ref: (1, C_in, tile)  ->  o_ref: (1, C_out, tile)
    o_ref[0] = _compute_block(x_ref[0], w_ref, scale_ref, bias_ref, o_ref.dtype)


def _kernel_packed(x_ref, w_ref, scale_ref, bias_ref, o_ref):
    # x_ref: (C_in, tile)     ->  o_ref: (C_out, tile)
    o_ref[...] = _compute_block(x_ref[...], w_ref, scale_ref, bias_ref,
                                o_ref.dtype)


@functools.partial(jax.jit, static_argnames=("stride", "tile_s", "out_dtype"))
def conv1x1_linear(x_nchw, weight, gamma, beta, running_mean, running_var,
                   stride=1, eps=1e-5, tile_s=4096, out_dtype=None):
    """Equivalent of Conv1x1Linear.forward (conv1x1 no-bias + BatchNorm2d, eval).

    x_nchw: (N, C_in, H, W) float32
    weight: (C_out, C_in, 1, 1) float32 (PyTorch Conv2d weight layout)
    """
    n, c_in, h, w = x_nchw.shape
    c_out = weight.shape[0]
    out_dtype = jnp.dtype(x_nchw.dtype if out_dtype is None else out_dtype)

    # Stride for a 1x1 conv is pure spatial subsampling.
    # TODO(synk): if the stride>1 path is hot, fold the subsampling into the
    # BlockSpec index_map over the 4-D input instead of this XLA slice pass.
    if stride != 1:
        x_nchw = x_nchw[:, :, ::stride, ::stride]
    h_out, w_out = x_nchw.shape[2], x_nchw.shape[3]
    hw = h_out * w_out

    # Contiguous merge of H,W -> (N, C_in, H*W): free, no HBM copy.
    x3d = x_nchw.reshape(n, c_in, hw)

    # Fold BN (inference):  y = scale * (W x) + (beta - mean*scale)
    inv_std = jax.lax.rsqrt(running_var.astype(jnp.float32) + eps)
    scale = gamma.astype(jnp.float32) * inv_std
    scale2d = scale.reshape(c_out, 1)
    bias2d = (beta.astype(jnp.float32)
              - running_mean.astype(jnp.float32) * scale).reshape(c_out, 1)
    # Weight kept UNSCALED in bf16 (scale stays f32 in the epilogue).
    w2d = weight.reshape(c_out, c_in).astype(jnp.bfloat16)

    x_bytes = jnp.dtype(x3d.dtype).itemsize
    o_bytes = out_dtype.itemsize

    # Lane-dense layout choice: for small feature maps (H*W < 128) pack the
    # batch into the lane axis so stores are not masked partial stores.
    packed = hw < 128
    if packed:
        x_in = x3d.transpose(1, 0, 2).reshape(c_in, n * hw)
        lane_extent = n * hw
        batch_blocks = 1
    else:
        x_in = x3d
        lane_extent = hw
        batch_blocks = n

    # Generation-aware VMEM budget (~80% of physical VMEM).
    vmem_cap = int(_vmem_capacity_bytes() * 0.80)
    const_bytes = c_out * c_in * 2 + 2 * c_out * 4          # resident w + scale/bias
    per_lane_bytes = 2 * c_in * x_bytes + 2 * c_out * o_bytes  # dbl-buffered tiles

    if lane_extent >= 128:
        tile = min(_round_down_128(tile_s), _round_down_128(lane_extent))
        budget_tile = _round_down_128(
            max(128, (vmem_cap - const_bytes) // max(per_lane_bytes, 1)))
        tile = min(tile, budget_tile)
        # Keep at least ~4 grid blocks so both v7x TensorCores stay busy.
        while tile > 128 and batch_blocks * _cdiv(lane_extent, tile) < 4:
            tile = _round_down_128(tile // 2)
    else:
        tile = lane_extent  # full-extent lane block; tiny problem, tiny cost

    grid_s = _cdiv(lane_extent, tile)
    vmem_used = const_bytes + tile * per_lane_bytes
    vmem_limit = int(min(max(vmem_used + (4 << 20), 16 << 20), vmem_cap))

    # Whole-array VMEM-resident operands: single-buffered, fetched once.
    const_spec = pl.BlockSpec(memory_space=pltpu.MemorySpace.VMEM)

    # TODO(synk): add a K-tiled (C_in) accumulator path (3rd "arbitrary" grid
    # axis + f32 VMEM scratch, pl.when init/finalize) for very large C_in
    # (~>2K) so the x/weight blocks stay within v7x's 64 MiB VMEM.
    # TODO(synk): optional fp8 (v7x) / int8 (v6e) streaming with quant scales
    # folded into the BN scale/bias epilogue.
    if packed:
        out2d = pl.pallas_call(
            _kernel_packed,
            out_shape=jax.ShapeDtypeStruct((c_out, lane_extent), out_dtype),
            grid_spec=pltpu.PrefetchScalarGridSpec(
                num_scalar_prefetch=0,
                grid=(grid_s,),
                in_specs=[
                    pl.BlockSpec((c_in, tile), lambda s: (0, s)),
                    const_spec, const_spec, const_spec,
                ],
                out_specs=pl.BlockSpec((c_out, tile), lambda s: (0, s)),
            ),
            compiler_params=pltpu.CompilerParams(
                dimension_semantics=("parallel",),
                vmem_limit_bytes=vmem_limit),
        )(x_in, w2d, scale2d, bias2d)
        out3d = out2d.reshape(c_out, n, hw).transpose(1, 0, 2)
    else:
        out3d = pl.pallas_call(
            _kernel_batched,
            out_shape=jax.ShapeDtypeStruct((n, c_out, hw), out_dtype),
            grid_spec=pltpu.PrefetchScalarGridSpec(
                num_scalar_prefetch=0,
                grid=(n, grid_s),
                in_specs=[
                    pl.BlockSpec((1, c_in, tile), lambda b, s: (b, 0, s)),
                    const_spec, const_spec, const_spec,
                ],
                out_specs=pl.BlockSpec((1, c_out, tile), lambda b, s: (b, 0, s)),
            ),
            compiler_params=pltpu.CompilerParams(
                dimension_semantics=("parallel", "parallel"),
                vmem_limit_bytes=vmem_limit),
        )(x_in, w2d, scale2d, bias2d)

    # (N, C_out, H*W) -> (N, C_out, H, W): contiguous split, no data movement.
    return out3d.reshape(n, c_out, h_out, w_out)


if __name__ == "__main__":
    key = jax.random.PRNGKey(0)
    k_x, k_w, k_g, k_b, k_m, k_v = jax.random.split(key, 6)

    N, C_IN, H, W = 2, 4, 16, 16
    C_OUT = 8

    x = jax.random.normal(k_x, (N, C_IN, H, W), dtype=jnp.float32)
    # Conv2d(in, out, 1, bias=False) weight shape: (C_out, C_in, 1, 1)
    weight = jax.random.normal(k_w, (C_OUT, C_IN, 1, 1), dtype=jnp.float32) * 0.1
    # BatchNorm2d params / running stats (deterministic, non-trivial).
    gamma = 1.0 + 0.1 * jax.random.normal(k_g, (C_OUT,), dtype=jnp.float32)
    beta = 0.1 * jax.random.normal(k_b, (C_OUT,), dtype=jnp.float32)
    running_mean = 0.1 * jax.random.normal(k_m, (C_OUT,), dtype=jnp.float32)
    running_var = jnp.abs(1.0 + 0.1 * jax.random.normal(k_v, (C_OUT,),
                                                        dtype=jnp.float32))

    def ref_fn(xin, stride):
        xs = xin[:, :, ::stride, ::stride]
        y = jnp.einsum("nchw,oc->nohw", xs, weight.reshape(C_OUT, C_IN))
        inv_std = jax.lax.rsqrt(running_var + 1e-5)
        return (y - running_mean[None, :, None, None]) * (
            gamma * inv_std)[None, :, None, None] + beta[None, :, None, None]

    # stride = 1 (lane-dense batched path), f32 output.
    out = conv1x1_linear(x, weight, gamma, beta, running_mean, running_var,
                         stride=1)
    jax.block_until_ready(out)
    assert out.shape == (N, C_OUT, H, W)
    assert out.dtype == x.dtype
    assert jnp.allclose(out, ref_fn(x, 1), atol=2e-2, rtol=2e-2)

    # stride = 2 -> H*W = 64 < 128: packed (C_in, N*H*W) lane-dense path.
    out2 = conv1x1_linear(x, weight, gamma, beta, running_mean, running_var,
                          stride=2)
    jax.block_until_ready(out2)
    assert out2.shape == (N, C_OUT, H // 2, W // 2)
    assert jnp.allclose(out2, ref_fn(x, 2), atol=2e-2, rtol=2e-2)

    # Optional bf16 output (halves write traffic when downstream tolerates it).
    out3 = conv1x1_linear(x, weight, gamma, beta, running_mean, running_var,
                          stride=1, out_dtype=jnp.bfloat16)
    jax.block_until_ready(out3)
    assert out3.dtype == jnp.bfloat16
    assert jnp.allclose(out3.astype(jnp.float32), ref_fn(x, 1),
                        atol=5e-2, rtol=5e-2)

    print("KERNEL_OK")
</pallas_src>

<mosaic_0001>
module attributes {stable_mosaic.version = 11 : i64} {
  func.func @_kernel_batched(%arg0: i32, %arg1: i32, %arg2: memref<1x4x128xf32, #tpu.memory_space<vmem>>, %arg3: memref<8x4xbf16, #tpu.memory_space<vmem>>, %arg4: memref<8x1xf32, #tpu.memory_space<vmem>>, %arg5: memref<8x1xf32, #tpu.memory_space<vmem>>, %arg6: memref<1x8x128xf32, #tpu.memory_space<vmem>>) attributes {dimension_semantics = [#tpu.dimension_semantics<parallel>, #tpu.dimension_semantics<parallel>], iteration_bounds = array<i64: 2, 2>, scalar_prefetch = 0 : i64, scratch_operands = 0 : i64, tpu.core_type = #tpu.core_type<tc>, window_params = [{transform_indices = @transform_0, window_bounds = array<i64: 1, 4, 128>}, {pipeline_mode = #tpu.pipeline_mode<synchronous>, transform_indices = @transform_1, window_bounds = array<i64: 8, 4>}, {pipeline_mode = #tpu.pipeline_mode<synchronous>, transform_indices = @transform_2, window_bounds = array<i64: 8, 1>}, {pipeline_mode = #tpu.pipeline_mode<synchronous>, transform_indices = @transform_3, window_bounds = array<i64: 8, 1>}, {transform_indices = @transform_4, window_bounds = array<i64: 1, 8, 128>}]} {
    %c0 = arith.constant 0 : index
    %c0_0 = arith.constant 0 : index
    %c0_1 = arith.constant 0 : index
    %0 = vector.load %arg2[%c0, %c0_0, %c0_1] : memref<1x4x128xf32, #tpu.memory_space<vmem>>, vector<1x4x128xf32>
    %1 = vector.shape_cast %0 : vector<1x4x128xf32> to vector<4x128xf32>
    %c0_2 = arith.constant 0 : index
    %c0_3 = arith.constant 0 : index
    %2 = vector.load %arg3[%c0_2, %c0_3] : memref<8x4xbf16, #tpu.memory_space<vmem>>, vector<8x4xbf16>
    %3 = arith.truncf %1 : vector<4x128xf32> to vector<4x128xbf16>
    %cst = arith.constant dense<0.000000e+00> : vector<8x128xf32>
    %4 = tpu.matmul %2, %3, %cst {dimension_numbers = #tpu.dot_dimension_numbers<[1], [0], [0], [1], [0, 0, 1, 1], [], []>} : vector<8x4xbf16>, vector<4x128xbf16>, vector<8x128xf32> -> vector<8x128xf32>
    %c0_4 = arith.constant 0 : index
    %c0_5 = arith.constant 0 : index
    %5 = vector.load %arg4[%c0_4, %c0_5] : memref<8x1xf32, #tpu.memory_space<vmem>>, vector<8x1xf32>
    %6 = vector.broadcast %5 : vector<8x1xf32> to vector<8x128xf32>
    %7 = arith.mulf %4, %6 : vector<8x128xf32>
    %c0_6 = arith.constant 0 : index
    %c0_7 = arith.constant 0 : index
    %8 = vector.load %arg5[%c0_6, %c0_7] : memref<8x1xf32, #tpu.memory_space<vmem>>, vector<8x1xf32>
    %9 = vector.broadcast %8 : vector<8x1xf32> to vector<8x128xf32>
    %10 = arith.addf %7, %9 : vector<8x128xf32>
    %c0_8 = arith.constant 0 : index
    %c0_9 = arith.constant 0 : index
    %c0_10 = arith.constant 0 : index
    %11 = vector.load %arg6[%c0_8, %c0_9, %c0_10] : memref<1x8x128xf32, #tpu.memory_space<vmem>>, vector<1x8x128xf32>
    %12 = vector.shape_cast %11 : vector<1x8x128xf32> to vector<8x128xf32>
    %13 = vector.shape_cast %10 : vector<8x128xf32> to vector<1x8x128xf32>
    tpu.vector_store %arg6[%c0_8, %c0_9, %c0_10], %13 {strides = array<i32>} : memref<1x8x128xf32, #tpu.memory_space<vmem>>, vector<1x8x128xf32>,
    return
  }
  func.func @transform_0(%arg0: i32, %arg1: i32) -> (i32, i32, i32) {
    %c0_i32 = arith.constant 0 : i32
    %c0_i32_0 = arith.constant 0 : i32
    return %arg0, %c0_i32, %arg1 : i32, i32, i32
  }
  func.func @transform_1(%arg0: i32, %arg1: i32) -> (i32, i32) {
    %c0_i32 = arith.constant 0 : i32
    %c0_i32_0 = arith.constant 0 : i32
    %c0_i32_1 = arith.constant 0 : i32
    return %c0_i32, %c0_i32_0 : i32, i32
  }
  func.func @transform_2(%arg0: i32, %arg1: i32) -> (i32, i32) {
    %c0_i32 = arith.constant 0 : i32
    %c0_i32_0 = arith.constant 0 : i32
    %c0_i32_1 = arith.constant 0 : i32
    return %c0_i32, %c0_i32_0 : i32, i32
  }
  func.func @transform_3(%arg0: i32, %arg1: i32) -> (i32, i32) {
    %c0_i32 = arith.constant 0 : i32
    %c0_i32_0 = arith.constant 0 : i32
    %c0_i32_1 = arith.constant 0 : i32
    return %c0_i32, %c0_i32_0 : i32, i32
  }
  func.func @transform_4(%arg0: i32, %arg1: i32) -> (i32, i32, i32) {
    %c0_i32 = arith.constant 0 : i32
    %c0_i32_0 = arith.constant 0 : i32
    return %arg0, %c0_i32, %arg1 : i32, i32, i32
  }
}

</mosaic_0001>

<llo_original>
// kernel: conv1x1_linear.1
$region0: #{conv1x1_linear.1}
  #allocation0 [shape = 'u32[]', space=smem, size = 0x4, offset = 0x4, fixed_abs, tag = 'smem constant byte address 0x4 - core index']
  #allocation1 [shape = 'u32[144,128]{1,0:T(1,128)}', space=vmem, size = 0x12000, scoped, tag = 'internal scratch']
  %s0 = inlined_call_operand.vmem [shape: f32[2,4,256], index: 0, kind: input, shape index: {}]
  %s1 = inlined_call_operand.vmem [shape: bf16[8,4], index: 1, kind: input, shape index: {}]
  %s2 = inlined_call_operand.vmem [shape: f32[8,1], index: 2, kind: input, shape index: {}]
  %s3 = inlined_call_operand.vmem [shape: f32[8,1], index: 3, kind: input, shape index: {}]
  %s4 = inlined_call_operand.vmem [shape: f32[2,8,256], index: 4, kind: output, shape index: {}]
  %s5 = sld [smem:[#allocation0]]
  $region49: #{conv1x1_linear.1} parent=0
    _
  %s7 = ssub.s32 1, %s5
  %s8 = scalar_select 0, %s7, %s5
  loop: start=0, step=1, limit=6
  $region2: #{conv1x1_linear.1} parent=0 // loop_pre_header
    _
  $region3: #{conv1x1_linear.1} parent=0 // loop_header
    %s10 = sphi 0, %s14
    %p11 = scmp.ge.s32.totalorder %s10, 6
    %s17 = sphi 0, %s29
    %s18 = sphi 0, %s25
    %s19 = sphi 0, %s17
    %s20 = sphi 0, %s18
    %s21 = sphi 0, %s19
    %s22 = sphi 0, %s20
    %s34 = sphi 0, %s36
    %s37 = sphi 0, %s34
    %s38 = sphi 0, %s37
    %s54 = sphi 0, %s38
    %s58 = sphi 0, %s58
    %s60 = sphi 0, %s58
    %s61 = sphi 0, %s60
    %s75 = sphi 0, %s61
    %s79 = sphi 0, %s79
    %s81 = sphi 0, %s79
    %s82 = sphi 0, %s81
    %s96 = sphi 0, %s82
    %s100 = sphi 0, %s100
    %s102 = sphi 0, %s100
    %s103 = sphi 0, %s102
    %s117 = sphi 0, %s103
    %s125 = sphi 0, %s127
    %s128 = sphi 0, %s125
    %s129 = sphi 0, %s128
    %s145 = sphi 0, %s129
  $region4: #{conv1x1_linear.1} parent=0 // loop_header_branch
    %13 = sbr.rel (%p11) target = $region8
  $region5: #{conv1x1_linear.1} parent=0 // loop_body
    %s15 = ssub.s32 %s10, 1
    %s16 = ssub.s32 %s10, 2
    %s23 = sadd.s32 1, %s18
    %p24 = scmp.ge.s32.totalorder %s23, 2
    %s25 = scalar_select %p24, 0, %s23
    %s26 = sadd.s32 1, %s17
    %s27 = scalar_select %p24, %s26, %s17
    %p28 = scmp.ge.s32.totalorder %s27, 2
    %s29 = scalar_select %p28, 0, %s27
    %s30 = ssub.s32 %s17, %s29
    %s31 = ssub.s32 %s18, %s25
    %s32 = sor.u32 %s30, %s31
    %p33 = scmp.eq.s32.totalorder %s32, 0
    %s35 = sadd.s32 %s34, 1
    %s36 = scalar_select %p33, %s34, %s35
    %p39 = pneg %p33
    %p40 = scmp.eq.s32.totalorder %s10, 3
    %p41 = por %p39, %p40
    %p42 = scmp.ne.s32.totalorder %s34, %s37
    %p43 = scmp.eq.s32.totalorder %s10, 0
    %p44 = por %p42, %p43
    %p45 = scmp.ne.s32.totalorder %s34, %s37
    %p46 = scmp.eq.s32.totalorder %s15, 3
    %p47 = por %p45, %p46
    %p48 = scmp.ne.s32.totalorder %s37, %s38
    %p49 = scmp.eq.s32.totalorder %s15, 0
    %p50 = por %p48, %p49
    %p51 = scmp.ne.s32.totalorder %s37, %s38
    %p52 = scmp.eq.s32.totalorder %s16, 3
    %p53 = por %p51, %p52
    %p55 = scmp.ne.s32.totalorder %s38, %s54
    %p56 = scmp.eq.s32.totalorder %s16, 0
    %p57 = por %p55, %p56
    %s59 = sadd.s32 %s58, 1
    %p62 = scmp.eq.s32.totalorder %s10, 3
    %p63 = scmp.ne.s32.totalorder %s58, %s60
    %p64 = scmp.eq.s32.totalorder %s10, 0
    %p65 = por %p63, %p64
    %p66 = scmp.ne.s32.totalorder %s58, %s60
    %p67 = scmp.eq.s32.totalorder %s15, 3
    %p68 = por %p66, %p67
    %p69 = scmp.ne.s32.totalorder %s60, %s61
    %p70 = scmp.eq.s32.totalorder %s15, 0
    %p71 = por %p69, %p70
    %p72 = scmp.ne.s32.totalorder %s60, %s61
    %p73 = scmp.eq.s32.totalorder %s16, 3
    %p74 = por %p72, %p73
    %p76 = scmp.ne.s32.totalorder %s61, %s75
    %p77 = scmp.eq.s32.totalorder %s16, 0
    %p78 = por %p76, %p77
    %s80 = sadd.s32 %s79, 1
    %p83 = scmp.eq.s32.totalorder %s10, 3
    %p84 = scmp.ne.s32.totalorder %s79, %s81
    %p85 = scmp.eq.s32.totalorder %s10, 0
    %p86 = por %p84, %p85
    %p87 = scmp.ne.s32.totalorder %s79, %s81
    %p88 = scmp.eq.s32.totalorder %s15, 3
    %p89 = por %p87, %p88
    %p90 = scmp.ne.s32.totalorder %s81, %s82
    %p91 = scmp.eq.s32.totalorder %s15, 0
    %p92 = por %p90, %p91
    %p93 = scmp.ne.s32.totalorder %s81, %s82
    %p94 = scmp.eq.s32.totalorder %s16, 3
    %p95 = por %p93, %p94
    %p97 = scmp.ne.s32.totalorder %s82, %s96
    %p98 = scmp.eq.s32.totalorder %s16, 0
    %p99 = por %p97, %p98
    %s101 = sadd.s32 %s100, 1
    %p104 = scmp.eq.s32.totalorder %s10, 3
    %p105 = scmp.ne.s32.totalorder %s100, %s102
    %p106 = scmp.eq.s32.totalorder %s10, 0
    %p107 = por %p105, %p106
    %p108 = scmp.ne.s32.totalorder %s100, %s102
    %p109 = scmp.eq.s32.totalorder %s15, 3
    %p110 = por %p108, %p109
    %p111 = scmp.ne.s32.totalorder %s102, %s103
    %p112 = scmp.eq.s32.totalorder %s15, 0
    %p113 = por %p111, %p112
    %p114 = scmp.ne.s32.totalorder %s102, %s103
    %p115 = scmp.eq.s32.totalorder %s16, 3
    %p116 = por %p114, %p115
    %p118 = scmp.ne.s32.totalorder %s103, %s117
    %p119 = scmp.eq.s32.totalorder %s16, 0
    %p120 = por %p118, %p119
    %s121 = ssub.s32 %s17, %s29
    %s122 = ssub.s32 %s18, %s25
    %s123 = sor.u32 %s121, %s122
    %p124 = scmp.eq.s32.totalorder %s123, 0
    %s126 = sadd.s32 %s125, 1
    %s127 = scalar_select %p124, %s125, %s126
    %p130 = pneg %p124
    %p131 = scmp.eq.s32.totalorder %s10, 3
    %p132 = por %p130, %p131
    %p133 = scmp.ne.s32.totalorder %s125, %s128
    %p134 = scmp.eq.s32.totalorder %s10, 0
    %p135 = por %p133, %p134
    %p136 = scmp.ne.s32.totalorder %s125, %s128
    %p137 = scmp.eq.s32.totalorder %s15, 3
    %p138 = por %p136, %p137
    %p139 = scmp.ne.s32.totalorder %s128, %s129
    %p140 = scmp.eq.s32.totalorder %s15, 0
    %p141 = por %p139, %p140
    %p142 = scmp.ne.s32.totalorder %s128, %s129
    %p143 = scmp.eq.s32.totalorder %s16, 3
    %p144 = por %p142, %p143
    %p146 = scmp.ne.s32.totalorder %s129, %s145
    %p147 = scmp.eq.s32.totalorder %s16, 0
    %p148 = por %p146, %p147
    %p149 = scmp.le.s32.totalorder 1, %s10
    %p150 = scmp.lt.s32.totalorder %s10, 5
    %p151 = pnand %p149, %p150
    %p152 = pneg %p151
    // Predicated region
    $region9: #{conv1x1_linear.1} parent=5 // pred_check
      _
    $region10: #{conv1x1_linear.1} parent=5 // pred_check_branch
      %154 = sbr.rel (%p151) target = $region12
    $region11: #{conv1x1_linear.1} parent=5 // pred_region
      %s155 = ssub.s32 %s10, 1
      // Predicated region
      $region13: #{conv1x1_linear.1} parent=11 // pred_check
        %p156 = pneg %p71
      $region14: #{conv1x1_linear.1} parent=11 // pred_check_branch
        %158 = sbr.rel (%p156) target = $region16
      $region15: #{conv1x1_linear.1} parent=11 // pred_region
        _
      $region16: #{conv1x1_linear.1} parent=11 // pred_fallthru
        _
      // Predicated region
      $region17: #{conv1x1_linear.1} parent=11 // pred_check
        %p159 = pneg %p92
      $region18: #{conv1x1_linear.1} parent=11 // pred_check_branch
        %161 = sbr.rel (%p159) target = $region20
      $region19: #{conv1x1_linear.1} parent=11 // pred_region
        _
      $region20: #{conv1x1_linear.1} parent=11 // pred_fallthru
        _
      // Predicated region
      $region21: #{conv1x1_linear.1} parent=11 // pred_check
        %p162 = pneg %p113
      $region22: #{conv1x1_linear.1} parent=11 // pred_check_branch
        %164 = sbr.rel (%p162) target = $region24
      $region23: #{conv1x1_linear.1} parent=11 // pred_region
        _
      $region24: #{conv1x1_linear.1} parent=11 // pred_fallthru
        _
    $region12: #{conv1x1_linear.1} parent=5 // pred_fallthru
      _
    %p165 = scmp.lt.s32.totalorder %s10, 4
    // Predicated region
    $region25: #{conv1x1_linear.1} parent=5 // pred_check
      %p166 = pneg %p165
    $region26: #{conv1x1_linear.1} parent=5 // pred_check_branch
      %168 = sbr.rel (%p166) target = $region28
    $region27: #{conv1x1_linear.1} parent=5 // pred_region
      // Predicated region
      $region29: #{conv1x1_linear.1} parent=27 // pred_check
        %p169 = pneg %p44
      $region30: #{conv1x1_linear.1} parent=27 // pred_check_branch
        %171 = sbr.rel (%p169) target = $region32
      $region31: #{conv1x1_linear.1} parent=27 // pred_region
        %p172 = scmp.lt.s32.totalorder %s17, 1
        %s173 = scalar_select %p172, %s17, 1
        %p174 = scmp.lt.s32.totalorder %s18, 1
        %s175 = scalar_select %p174, %s18, 1
        %s176 = smul.addr %s173, 2
        %s177 = sadd.s32 %s175, %s176
        %s178 = smul.addr %s177, 4
        %s179 = scalar_lea.vmem %s0, %s178
      $region32: #{conv1x1_linear.1} parent=27 // pred_fallthru
        _
    $region28: #{conv1x1_linear.1} parent=5 // pred_fallthru
      _
    %p180 = scmp.le.s32.totalorder 1, %s10
    %p181 = scmp.lt.s32.totalorder %s10, 5
    %p182 = pnand %p180, %p181
    %p183 = pneg %p182
    // Predicated region
    $region33: #{conv1x1_linear.1} parent=5 // pred_check
      _
    $region34: #{conv1x1_linear.1} parent=5 // pred_check_branch
      %185 = sbr.rel (%p182) target = $region36
    $region35: #{conv1x1_linear.1} parent=5 // pred_region
      %s186 = ssub.s32 %s10, 1
      %p187 = scmp.lt.s32.totalorder %s19, 1
      %s188 = scalar_select %p187, %s19, 1
      %p189 = scmp.lt.s32.totalorder %s20, 1
      %s190 = scalar_select %p189, %s20, 1
      %s191 = smul.addr %s188, 2
      %s192 = sadd.s32 %s190, %s191
      %s193 = smul.addr %s192, 4
      %s194 = scalar_lea.vmem %s0, %s193
      %p195 = pneg %p50
      %p196 = pneg %p47
      %p197 = pneg %p71
      %p198 = pneg %p68
      %p199 = pneg %p92
      %p200 = pneg %p89
      %p201 = pneg %p113
      %p202 = pneg %p110
      %p203 = pneg %p141
      %p204 = pneg %p138
      %p205 = scmp.lt.s32.totalorder %s19, 1
      %s206 = scalar_select %p205, %s19, 1
      %p207 = scmp.lt.s32.totalorder %s20, 1
      %s208 = scalar_select %p207, %s20, 1
      %s209 = smul.addr %s206, 2
      %s210 = sadd.s32 %s208, %s209
      %s211 = smul.addr %s210, 8
      %s212 = scalar_lea.vmem %s4, %s211
      %p213 = scmp.lt.s32.totalorder %s19, 1
      %s214 = scalar_select %p213, %s19, 1
      %p215 = scmp.lt.s32.totalorder %s20, 1
      %s216 = scalar_select %p215, %s20, 1
      %s217 = smul.addr %s214, 2
      %s218 = sadd.s32 %s216, %s217
      %s219 = smul.addr %s218, 4
      %s220 = scalar_lea.vmem %s0, %s219
      %p221 = scmp.lt.s32.totalorder %s19, 1
      %s222 = scalar_select %p221, %s19, 1
      %p223 = scmp.lt.s32.totalorder %s20, 1
      %s224 = scalar_select %p223, %s20, 1
      %s225 = smul.addr %s222, 2
      %s226 = sadd.s32 %s224, %s225
      %s227 = smul.addr %s226, 8
      %s228 = scalar_lea.vmem %s4, %s227
      %v230 = vld [vmem:[%s220] sm:$0xf]
      %v231 = vld [vmem:[%s1] sm:$0xf]
      %v232 = vpack.c.bf16 %v230, %v230
      %vm233 = vcmask 31744
      %v235 = vsel %vm233, %v231, 0
      %vm237 = vcmask 1041408
      %v239 = vsel %vm237, %v232, 0
      %241 = vmatprep.subr.bf16.mxu0 0
      %242 = vmatpush1.bf16.msra.mxu0 %v239
      %243 = vmatprep.subr.bf16.mxu0 0
      %244 = vmatpush1.bf16.msra.mxu0 0
      %245 = vmatprep.subr.bf16.mxu0 0
      %246 = vmatpush1.bf16.msra.mxu0 0
      %247 = vmatprep.subr.bf16.mxu0 0
      %248 = vmatpush1.bf16.msra.mxu0 0
      %249 = vmatprep.subr.bf16.mxu0 0
      %250 = vmatpush1.bf16.msra.mxu0 0
      %251 = vmatprep.subr.bf16.mxu0 0
      %252 = vmatpush1.bf16.msra.mxu0 0
      %253 = vmatprep.subr.bf16.mxu0 0
      %254 = vmatpush1.bf16.msra.mxu0 0
      %255 = vmatprep.subr.bf16.mxu0 0
      %256 = vmatpush1.bf16.msra.mxu0 0
      %257 = vmatprep.subr.bf16.mxu0 0
      %258 = vmatpush1.bf16.msra.mxu0 0
      %259 = vmatprep.subr.bf16.mxu0 0
      %260 = vmatpush1.bf16.msra.mxu0 0
      %261 = vmatprep.subr.bf16.mxu0 0
      %262 = vmatpush1.bf16.msra.mxu0 0
      %263 = vmatprep.subr.bf16.mxu0 0
      %264 = vmatpush1.bf16.msra.mxu0 0
      %265 = vmatprep.subr.bf16.mxu0 0
      %266 = vmatpush1.bf16.msra.mxu0 0
      %267 = vmatprep.subr.bf16.mxu0 0
      %268 = vmatpush1.bf16.msra.mxu0 0
      %269 = vmatprep.subr.bf16.mxu0 0
      %270 = vmatpush1.bf16.msra.mxu0 0
      %271 = vmatprep.subr.bf16.mxu0 0
      %272 = vmatpush1.bf16.msra.mxu0 0
      %273 = vmatprep.mubr.bf16.mxu0 0
      %274 = vmatmul.mubr.bf16.gmra.mrb[0].mxu0 %v235
      %v275 = vpop.f32.mrb[0].mxu0
      %v276 = vadd.f32 0.0, %v275
      %v277 = vpop.f32.mrb[0].mxu0
      %v278 = vpop.f32.mrb[0].mxu0
      %v279 = vpop.f32.mrb[0].mxu0
      %280 = vdwg.mxu0
      %v281 = vld [vmem:[%s2] sm:$0xff]
      %283 = vset.pattern.permute.xlu0 0
      %284 = vperm.xlu0 %283, %v281
      %v285 = vpop.permute.xlu0 %284
      %v287 = vmul.f32 %v276, %v285
      %v288 = vld [vmem:[%s3] sm:$0xff]
      %290 = vset.pattern.permute.xlu0 0
      %291 = vperm.xlu0 %290, %v288
      %v292 = vpop.permute.xlu0 %291
      %v294 = vadd.f32 %v287, %v292
      %295 = vst [vmem:[%s228] sm:$0xff] %v294
      %p296 = scmp.lt.s32.totalorder %s19, 1
      %s297 = scalar_select %p296, %s19, 1
      %p298 = scmp.lt.s32.totalorder %s20, 1
      %s299 = scalar_select %p298, %s20, 1
      %s300 = smul.addr %s297, 2
      %s301 = sadd.s32 %s299, %s300
      %s302 = smul.addr %s301, 8
      %s303 = scalar_lea.vmem %s4, %s302
      // Predicated region
      $region37: #{conv1x1_linear.1} parent=35 // pred_check
        %p304 = pneg %p138
      $region38: #{conv1x1_linear.1} parent=35 // pred_check_branch
        %306 = sbr.rel (%p304) target = $region40
      $region39: #{conv1x1_linear.1} parent=35 // pred_region
        _
      $region40: #{conv1x1_linear.1} parent=35 // pred_fallthru
        _
    $region36: #{conv1x1_linear.1} parent=5 // pred_fallthru
      _
    %p307 = scmp.le.s32.totalorder 2, %s10
    // Predicated region
    $region41: #{conv1x1_linear.1} parent=5 // pred_check
      %p308 = pneg %p307
    $region42: #{conv1x1_linear.1} parent=5 // pred_check_branch
      %310 = sbr.rel (%p308) target = $region44
    $region43: #{conv1x1_linear.1} parent=5 // pred_region
      %s311 = ssub.s32 %s10, 2
      // Predicated region
      $region45: #{conv1x1_linear.1} parent=43 // pred_check
        %p312 = pneg %p144
      $region46: #{conv1x1_linear.1} parent=43 // pred_check_branch
        %314 = sbr.rel (%p312) target = $region48
      $region47: #{conv1x1_linear.1} parent=43 // pred_region
        %p315 = scmp.lt.s32.totalorder %s21, 1
        %s316 = scalar_select %p315, %s21, 1
        %p317 = scmp.lt.s32.totalorder %s22, 1
        %s318 = scalar_select %p317, %s22, 1
        %s319 = smul.addr %s316, 2
        %s320 = sadd.s32 %s318, %s319
        %s321 = smul.addr %s320, 8
        %s322 = scalar_lea.vmem %s4, %s321
      $region48: #{conv1x1_linear.1} parent=43 // pred_fallthru
        _
    $region44: #{conv1x1_linear.1} parent=5 // pred_fallthru
      _
  $region6: #{conv1x1_linear.1} parent=0 // loop_footer
    %s14 = sadd.s32 1, %s10
  $region7: #{conv1x1_linear.1} parent=0 // loop_footer_branch
    %9 = sbr.rel target = $region3
  $region8: #{conv1x1_linear.1} parent=0 // loop_exit
    _

</llo_original>
